<compile_context>
chip_gen: v5e
topology: v5e:2x2
jax: 0.10.0
libtpu: 0.0.40
codegen_flags: <defaults>
</compile_context>

<pallas_src>
import math

import jax
import jax.numpy as jnp
from jax.experimental import pallas as pl
from jax.experimental.pallas import tpu as pltpu


def _film_kernel(x_ref, c_ref, w_ref, b_ref, o_ref):
    """One row-tile of FiLM.

    x_ref : (TM, D)    features to modulate
    c_ref : (TM, A)    conditioning attributes
    w_ref : (A, 2D)    generator weight, pre-transposed (gamma | beta halves)
    b_ref : (1, 2D)    generator bias   (gamma | beta halves)
    o_ref : (TM, D)    output = x * gamma + beta
    """
    D = x_ref.shape[-1]
    # Single fused MXU matmul with f32 accumulation, then bias add.
    z = jnp.dot(c_ref[...], w_ref[...], preferred_element_type=jnp.float32) + b_ref[...]
    gamma = z[:, :D]          # static, lane-aligned slice when D % 128 == 0
    beta = z[:, D:]
    o_ref[...] = (x_ref[...].astype(jnp.float32) * gamma + beta).astype(o_ref.dtype)


def _pick_tile_m(M, D, itemsize, tile_m=None):
    """Row-tile size: VMEM-budgeted, dtype-aligned, >= ~4 grid steps when possible."""
    row_align = {4: 8, 2: 16, 1: 32}.get(itemsize, 8)
    if tile_m is not None:
        return max(row_align, (tile_m // row_align) * row_align)
    target_bytes = 1 << 20                                  # ~1 MiB per x tile
    tm = (target_bytes // max(1, D * itemsize)) // row_align * row_align
    tm = max(row_align, min(4096, tm))
    # Cap so the grid has >= ~4 steps (>= 2 tiles keeps both v7x TCs busy).
    cap = max(row_align, pl.cdiv(pl.cdiv(M, 4), row_align) * row_align)
    return min(tm, cap)


def film_forward(x, c, weight, bias, *, tile_m=None):
    """Fused FiLM forward.

    x      : (..., input_dim)
    c      : (..., attribute_dim)            (same leading dims as x)
    weight : (2*input_dim, attribute_dim)    torch nn.Linear layout
    bias   : (2*input_dim,)

    Note: keep input_dim a multiple of 128 for the lane-dense fast path
    (non-multiples are still correct, just slower masked stores).
    """
    D = x.shape[-1]
    A = c.shape[-1]
    assert weight.shape == (2 * D, A) and bias.shape == (2 * D,)
    assert x.shape[:-1] == c.shape[:-1], "x and c must share leading dims"
    lead = x.shape[:-1]
    M = math.prod(lead) if lead else 1

    x2 = x.reshape(M, D)
    c2 = c.reshape(M, A)

    # weight.T is (A, 2D): first D lanes -> gamma weights, last D -> beta weights.
    # TODO(synk): hoist this transpose out of the per-call path if the same
    # generator weights are reused across many diffusion steps.
    wt = jnp.transpose(weight)          # (A, 2D)
    b2 = bias.reshape(1, 2 * D)         # (1, 2D)

    x_bytes = jnp.dtype(x.dtype).itemsize
    c_bytes = jnp.dtype(c.dtype).itemsize
    w_bytes = jnp.dtype(wt.dtype).itemsize

    tm = _pick_tile_m(M, D, x_bytes, tile_m)
    grid = (pl.cdiv(M, tm),)            # no padding: partial last tile is masked

    # Explicit VMEM budget: x/c/out double-buffered, weights/bias single-buffered.
    needed = (2 * tm * D * x_bytes          # x
              + 2 * tm * A * c_bytes        # c
              + 2 * tm * D * x_bytes        # out
              + A * 2 * D * w_bytes         # weight (single-buffered)
              + 2 * D * w_bytes)            # bias   (single-buffered)
    vmem_limit = int(min(max(2 * needed, 16 << 20), 64 << 20))

    cost = pl.CostEstimate(
        flops=2 * M * A * (2 * D) + 2 * M * D,
        transcendentals=0,
        bytes_accessed=(2 * M * D * x_bytes          # x read + out write
                        + M * A * c_bytes
                        + A * 2 * D * w_bytes + 2 * D * w_bytes),
    )

    out = pl.pallas_call(
        _film_kernel,
        out_shape=jax.ShapeDtypeStruct((M, D), x.dtype),
        grid=grid,
        in_specs=[
            pl.BlockSpec((tm, D), lambda i: (i, 0)),                 # x tile
            pl.BlockSpec((tm, A), lambda i: (i, 0)),                 # c tile
            pl.BlockSpec((A, 2 * D), lambda i: (0, 0),
                         pipeline_mode=pl.Buffered(1)),              # W (resident)
            pl.BlockSpec((1, 2 * D), lambda i: (0, 0),
                         pipeline_mode=pl.Buffered(1)),              # bias (resident)
        ],
        out_specs=pl.BlockSpec((tm, D), lambda i: (i, 0)),
        compiler_params=pltpu.CompilerParams(
            dimension_semantics=("parallel",),
            vmem_limit_bytes=vmem_limit,
        ),
        cost_estimate=cost,
    )(x2, c2, wt, b2)

    return out.reshape(*lead, D)


def film_reference(x, c, weight, bias):
    """Pure-JAX reference matching the PyTorch module."""
    D = x.shape[-1]
    z = jnp.einsum('...a,da->...d', c, weight) + bias
    return x * z[..., :D] + z[..., D:]


if __name__ == "__main__":
    # FiLM(input_dim=128, attribute_dim=32); x: (2, 8, 128), c: (2, 8, 32).
    # input_dim is a multiple of 128 so the output layout is lane-dense.
    B, S = 2, 8
    input_dim, attribute_dim = 128, 32

    key = jax.random.PRNGKey(0)
    kx, kc, kw, kb = jax.random.split(key, 4)
    x = jax.random.normal(kx, (B, S, input_dim), jnp.float32)
    c = jax.random.normal(kc, (B, S, attribute_dim), jnp.float32)
    # torch nn.Linear(attribute_dim, 2*input_dim): weight (2*input_dim, attribute_dim)
    weight = jax.random.normal(kw, (2 * input_dim, attribute_dim), jnp.float32) * 0.1
    bias = jax.random.normal(kb, (2 * input_dim,), jnp.float32) * 0.1

    # Auto tm: M=16 rows -> tm=8 -> 2 "parallel" row tiles, no padding needed.
    y = film_forward(x, c, weight, bias)
    y = jax.block_until_ready(y)

    y_ref = jax.block_until_ready(film_reference(x, c, weight, bias))

    assert y.shape == x.shape and y.dtype == x.dtype
    assert jnp.allclose(y, y_ref, atol=1e-4, rtol=1e-4), "mismatch vs reference"

    print("KERNEL_OK")
</pallas_src>

<mosaic_0001>
module attributes {stable_mosaic.version = 11 : i64} {
  func.func @_film_kernel(%arg0: i32, %arg1: memref<8x128xf32, #tpu.memory_space<vmem>>, %arg2: memref<8x32xf32, #tpu.memory_space<vmem>>, %arg3: memref<32x256xf32, #tpu.memory_space<vmem>>, %arg4: memref<1x256xf32, #tpu.memory_space<vmem>>, %arg5: memref<8x128xf32, #tpu.memory_space<vmem>>) attributes {dimension_semantics = [#tpu.dimension_semantics<parallel>], iteration_bounds = array<i64: 2>, scalar_prefetch = 0 : i64, scratch_operands = 0 : i64, tpu.core_type = #tpu.core_type<tc>, window_params = [{transform_indices = @transform_0, window_bounds = array<i64: 8, 128>}, {transform_indices = @transform_1, window_bounds = array<i64: 8, 32>}, {pipeline_mode = #tpu.pipeline_mode<synchronous>, transform_indices = @transform_2, window_bounds = array<i64: 32, 256>}, {pipeline_mode = #tpu.pipeline_mode<synchronous>, transform_indices = @transform_3, window_bounds = array<i64: 1, 256>}, {transform_indices = @transform_4, window_bounds = array<i64: 8, 128>}]} {
    %c0 = arith.constant 0 : index
    %c0_0 = arith.constant 0 : index
    %0 = vector.load %arg2[%c0, %c0_0] : memref<8x32xf32, #tpu.memory_space<vmem>>, vector<8x32xf32>
    %c0_1 = arith.constant 0 : index
    %c0_2 = arith.constant 0 : index
    %1 = vector.load %arg3[%c0_1, %c0_2] : memref<32x256xf32, #tpu.memory_space<vmem>>, vector<32x256xf32>
    %cst = arith.constant dense<0.000000e+00> : vector<8x256xf32>
    %2 = tpu.matmul %0, %1, %cst {dimension_numbers = #tpu.dot_dimension_numbers<[1], [0], [0], [1], [0, 0, 1, 1], [], []>} : vector<8x32xf32>, vector<32x256xf32>, vector<8x256xf32> -> vector<8x256xf32>
    %c0_3 = arith.constant 0 : index
    %c0_4 = arith.constant 0 : index
    %3 = vector.load %arg4[%c0_3, %c0_4] : memref<1x256xf32, #tpu.memory_space<vmem>>, vector<1x256xf32>
    %4 = vector.broadcast %3 : vector<1x256xf32> to vector<8x256xf32>
    %5 = arith.addf %2, %4 : vector<8x256xf32>
    %6 = vector.extract_strided_slice %5 {offsets = [0, 0], sizes = [8, 128], strides = [1, 1]} : vector<8x256xf32> to vector<8x128xf32>
    %7 = vector.extract_strided_slice %5 {offsets = [0, 128], sizes = [8, 128], strides = [1, 1]} : vector<8x256xf32> to vector<8x128xf32>
    %c0_5 = arith.constant 0 : index
    %c0_6 = arith.constant 0 : index
    %8 = vector.load %arg1[%c0_5, %c0_6] : memref<8x128xf32, #tpu.memory_space<vmem>>, vector<8x128xf32>
    %9 = arith.mulf %8, %6 : vector<8x128xf32>
    %10 = arith.addf %9, %7 : vector<8x128xf32>
    %c0_7 = arith.constant 0 : index
    %c0_8 = arith.constant 0 : index
    %11 = vector.load %arg5[%c0_7, %c0_8] : memref<8x128xf32, #tpu.memory_space<vmem>>, vector<8x128xf32>
    tpu.vector_store %arg5[%c0_7, %c0_8], %10 {strides = array<i32>} : memref<8x128xf32, #tpu.memory_space<vmem>>, vector<8x128xf32>,
    return
  }
  func.func @transform_0(%arg0: i32) -> (i32, i32) {
    %c0_i32 = arith.constant 0 : i32
    %c0_i32_0 = arith.constant 0 : i32
    return %arg0, %c0_i32 : i32, i32
  }
  func.func @transform_1(%arg0: i32) -> (i32, i32) {
    %c0_i32 = arith.constant 0 : i32
    %c0_i32_0 = arith.constant 0 : i32
    return %arg0, %c0_i32 : i32, i32
  }
  func.func @transform_2(%arg0: i32) -> (i32, i32) {
    %c0_i32 = arith.constant 0 : i32
    %c0_i32_0 = arith.constant 0 : i32
    %c0_i32_1 = arith.constant 0 : i32
    return %c0_i32, %c0_i32_0 : i32, i32
  }
  func.func @transform_3(%arg0: i32) -> (i32, i32) {
    %c0_i32 = arith.constant 0 : i32
    %c0_i32_0 = arith.constant 0 : i32
    %c0_i32_1 = arith.constant 0 : i32
    return %c0_i32, %c0_i32_0 : i32, i32
  }
  func.func @transform_4(%arg0: i32) -> (i32, i32) {
    %c0_i32 = arith.constant 0 : i32
    %c0_i32_0 = arith.constant 0 : i32
    return %arg0, %c0_i32 : i32, i32
  }
}

</mosaic_0001>

<llo_original>
// kernel: tpu_custom_call.1
$region0: #{tpu_custom_call.1}
  #allocation0 [shape = 'u32[]', space=smem, size = 0x4, offset = 0x4, fixed_abs, tag = 'smem constant byte address 0x4 - core index']
  #allocation1 [shape = 'u32[72,128]{1,0:T(1,128)}', space=vmem, size = 0x9000, scoped, tag = 'internal scratch']
  %s0 = inlined_call_operand.hbm [shape: f32[16,128], index: 0, kind: input, shape index: {}]
  %s1 = inlined_call_operand.hbm [shape: f32[16,32], index: 1, kind: input, shape index: {}]
  %s2 = inlined_call_operand.hbm [shape: f32[32,256], index: 2, kind: input, shape index: {}]
  %s3 = inlined_call_operand.vmem [shape: f32[1,256], index: 3, kind: input, shape index: {}]
  %s4 = inlined_call_operand.hbm [shape: f32[16,128], index: 4, kind: output, shape index: {}]
  %s5 = sld [smem:[#allocation0]]
  $region61: #{tpu_custom_call.1} parent=0
    _
  %s7 = ssub.s32 1, %s5
  %s8 = scalar_select 0, %s7, %s5
  $region1: #{tpu_custom_call.1} parent=0
    #allocation2 [shape = 'u8[8192]{0}', space=vmem, size = 0x2000, scoped, tag = 'input window, operand 0']
    #allocation3 [shape = 's32[2]{0}', space=sflag, size = 0x8, scoped, tag = 'scoped memory for tpu_custom_call.1']
    #allocation4 [shape = 's32[2]{0}', space=sflag, size = 0x8, scoped, tag = 'scoped memory for tpu_custom_call.1']
    #allocation5 [shape = 'u8[8192]{0}', space=vmem, size = 0x2000, scoped, tag = 'input window, operand 1']
    #allocation6 [shape = 's32[2]{0}', space=sflag, size = 0x8, scoped, tag = 'scoped memory for tpu_custom_call.1']
    #allocation7 [shape = 'u8[32768]{0}', space=vmem, size = 0x8000, scoped, tag = 'input window, operand 2, single buffered']
    #allocation8 [shape = 'u8[8192]{0}', space=vmem, size = 0x2000, scoped, tag = 'output window, operand 0']
    %9 = vsyncpa [#allocation3], 0
    %s10 = scalar_lea.sflag [#allocation3], 1
    %11 = vsyncpa %s10, 0
    %12 = vsyncpa [#allocation6], 0
    %s13 = scalar_lea.sflag [#allocation6], 1
    %14 = vsyncpa %s13, 0
    %15 = vsyncpa [#allocation4], 0
    %s16 = scalar_lea.sflag [#allocation4], 1
    %17 = vsyncpa %s16, 0
    loop: start=0, step=1, limit=4
    $region2: #{tpu_custom_call.1} parent=1 // loop_pre_header
      _
    $region3: #{tpu_custom_call.1} parent=1 // loop_header
      %s19 = sphi 0, %s23
      %p20 = scmp.ge.s32.totalorder %s19, 4
      %s29 = sphi 0, %s31
      %s32 = sphi 0, %s29
      %s33 = sphi 0, %s32
      %s49 = sphi 0, %s33
      %s55 = sphi 0, %s57
      %s58 = sphi 0, %s55
      %s59 = sphi 0, %s58
      %s75 = sphi 0, %s59
      %s79 = sphi 0, %s79
      %s81 = sphi 0, %s79
      %s82 = sphi 0, %s81
      %s96 = sphi 0, %s82
      %s100 = sphi 0, %s100
      %s102 = sphi 0, %s100
      %s103 = sphi 0, %s102
      %s117 = sphi 0, %s103
      %s123 = sphi 0, %s125
      %s126 = sphi 0, %s123
      %s127 = sphi 0, %s126
      %s143 = sphi 0, %s127
    $region4: #{tpu_custom_call.1} parent=1 // loop_header_branch
      %22 = sbr.rel (%p20) target = $region8
    $region5: #{tpu_custom_call.1} parent=1 // loop_body
      %s24 = ssub.s32 %s19, 1
      %s25 = ssub.s32 %s19, 2
      %s26 = sadd.s32 %s19, 1
      %s27 = ssub.s32 %s19, %s26
      %p28 = scmp.eq.s32.totalorder %s27, 0
      %s30 = sadd.s32 %s29, 1
      %s31 = scalar_select %p28, %s29, %s30
      %p34 = pneg %p28
      %p35 = scmp.eq.s32.totalorder %s19, 1
      %p36 = por %p34, %p35
      %p37 = scmp.ne.s32.totalorder %s29, %s32
      %p38 = scmp.eq.s32.totalorder %s19, 0
      %p39 = por %p37, %p38
      %p40 = scmp.ne.s32.totalorder %s29, %s32
      %p41 = scmp.eq.s32.totalorder %s24, 1
      %p42 = por %p40, %p41
      %p43 = scmp.ne.s32.totalorder %s32, %s33
      %p44 = scmp.eq.s32.totalorder %s24, 0
      %p45 = por %p43, %p44
      %p46 = scmp.ne.s32.totalorder %s32, %s33
      %p47 = scmp.eq.s32.totalorder %s25, 1
      %p48 = por %p46, %p47
      %p50 = scmp.ne.s32.totalorder %s33, %s49
      %p51 = scmp.eq.s32.totalorder %s25, 0
      %p52 = por %p50, %p51
      %s53 = ssub.s32 %s19, %s26
      %p54 = scmp.eq.s32.totalorder %s53, 0
      %s56 = sadd.s32 %s55, 1
      %s57 = scalar_select %p54, %s55, %s56
      %p60 = pneg %p54
      %p61 = scmp.eq.s32.totalorder %s19, 1
      %p62 = por %p60, %p61
      %p63 = scmp.ne.s32.totalorder %s55, %s58
      %p64 = scmp.eq.s32.totalorder %s19, 0
      %p65 = por %p63, %p64
      %p66 = scmp.ne.s32.totalorder %s55, %s58
      %p67 = scmp.eq.s32.totalorder %s24, 1
      %p68 = por %p66, %p67
      %p69 = scmp.ne.s32.totalorder %s58, %s59
      %p70 = scmp.eq.s32.totalorder %s24, 0
      %p71 = por %p69, %p70
      %p72 = scmp.ne.s32.totalorder %s58, %s59
      %p73 = scmp.eq.s32.totalorder %s25, 1
      %p74 = por %p72, %p73
      %p76 = scmp.ne.s32.totalorder %s59, %s75
      %p77 = scmp.eq.s32.totalorder %s25, 0
      %p78 = por %p76, %p77
      %s80 = sadd.s32 %s79, 1
      %p83 = scmp.eq.s32.totalorder %s19, 1
      %p84 = scmp.ne.s32.totalorder %s79, %s81
      %p85 = scmp.eq.s32.totalorder %s19, 0
      %p86 = por %p84, %p85
      %p87 = scmp.ne.s32.totalorder %s79, %s81
      %p88 = scmp.eq.s32.totalorder %s24, 1
      %p89 = por %p87, %p88
      %p90 = scmp.ne.s32.totalorder %s81, %s82
      %p91 = scmp.eq.s32.totalorder %s24, 0
      %p92 = por %p90, %p91
      %p93 = scmp.ne.s32.totalorder %s81, %s82
      %p94 = scmp.eq.s32.totalorder %s25, 1
      %p95 = por %p93, %p94
      %p97 = scmp.ne.s32.totalorder %s82, %s96
      %p98 = scmp.eq.s32.totalorder %s25, 0
      %p99 = por %p97, %p98
      %s101 = sadd.s32 %s100, 1
      %p104 = scmp.eq.s32.totalorder %s19, 1
      %p105 = scmp.ne.s32.totalorder %s100, %s102
      %p106 = scmp.eq.s32.totalorder %s19, 0
      %p107 = por %p105, %p106
      %p108 = scmp.ne.s32.totalorder %s100, %s102
      %p109 = scmp.eq.s32.totalorder %s24, 1
      %p110 = por %p108, %p109
      %p111 = scmp.ne.s32.totalorder %s102, %s103
      %p112 = scmp.eq.s32.totalorder %s24, 0
      %p113 = por %p111, %p112
      %p114 = scmp.ne.s32.totalorder %s102, %s103
      %p115 = scmp.eq.s32.totalorder %s25, 1
      %p116 = por %p114, %p115
      %p118 = scmp.ne.s32.totalorder %s103, %s117
      %p119 = scmp.eq.s32.totalorder %s25, 0
      %p120 = por %p118, %p119
      %s121 = ssub.s32 %s19, %s26
      %p122 = scmp.eq.s32.totalorder %s121, 0
      %s124 = sadd.s32 %s123, 1
      %s125 = scalar_select %p122, %s123, %s124
      %p128 = pneg %p122
      %p129 = scmp.eq.s32.totalorder %s19, 1
      %p130 = por %p128, %p129
      %p131 = scmp.ne.s32.totalorder %s123, %s126
      %p132 = scmp.eq.s32.totalorder %s19, 0
      %p133 = por %p131, %p132
      %p134 = scmp.ne.s32.totalorder %s123, %s126
      %p135 = scmp.eq.s32.totalorder %s24, 1
      %p136 = por %p134, %p135
      %p137 = scmp.ne.s32.totalorder %s126, %s127
      %p138 = scmp.eq.s32.totalorder %s24, 0
      %p139 = por %p137, %p138
      %p140 = scmp.ne.s32.totalorder %s126, %s127
      %p141 = scmp.eq.s32.totalorder %s25, 1
      %p142 = por %p140, %p141
      %p144 = scmp.ne.s32.totalorder %s127, %s143
      %p145 = scmp.eq.s32.totalorder %s25, 0
      %p146 = por %p144, %p145
      %p147 = scmp.le.s32.totalorder 1, %s19
      %p148 = scmp.lt.s32.totalorder %s19, 3
      %p149 = pnand %p147, %p148
      %p150 = pneg %p149
      // Predicated region
      $region9: #{tpu_custom_call.1} parent=5 // pred_check
        _
      $region10: #{tpu_custom_call.1} parent=5 // pred_check_branch
        %152 = sbr.rel (%p149) target = $region12
      $region11: #{tpu_custom_call.1} parent=5 // pred_region
        %s153 = ssub.s32 %s19, 1
        // Predicated region
        $region13: #{tpu_custom_call.1} parent=11 // pred_check
          %p154 = pneg %p92
        $region14: #{tpu_custom_call.1} parent=11 // pred_check_branch
          %156 = sbr.rel (%p154) target = $region16
        $region15: #{tpu_custom_call.1} parent=11 // pred_region
          %158 = vsyncadd [#allocation6], 0
          %s159 = sshll.u32 %s2, 4
          %s160 = int_to_ptr.hbm [resolvable:$true] %s159
          %s161 = sshll.u32 [#allocation7], 4
          %s162 = int_to_ptr.vmem [resolvable:$true] %s161
          %167 = dma.hbm_to_vmem [thread:$0]  %s160, 1024, %s162, [#allocation6], 256, 256, 16
        $region16: #{tpu_custom_call.1} parent=11 // pred_fallthru
          _
        // Predicated region
        $region17: #{tpu_custom_call.1} parent=11 // pred_check
          %p168 = pneg %p113
        $region18: #{tpu_custom_call.1} parent=11 // pred_check_branch
          %170 = sbr.rel (%p168) target = $region20
        $region19: #{tpu_custom_call.1} parent=11 // pred_region
          _
        $region20: #{tpu_custom_call.1} parent=11 // pred_fallthru
          _
      $region12: #{tpu_custom_call.1} parent=5 // pred_fallthru
        _
      %p171 = scmp.lt.s32.totalorder %s19, 2
      // Predicated region
      $region21: #{tpu_custom_call.1} parent=5 // pred_check
        %p172 = pneg %p171
      $region22: #{tpu_custom_call.1} parent=5 // pred_check_branch
        %174 = sbr.rel (%p172) target = $region24
      $region23: #{tpu_custom_call.1} parent=5 // pred_region
        // Predicated region
        $region25: #{tpu_custom_call.1} parent=23 // pred_check
          %p175 = pneg %p39
        $region26: #{tpu_custom_call.1} parent=23 // pred_check_branch
          %177 = sbr.rel (%p175) target = $region28
        $region27: #{tpu_custom_call.1} parent=23 // pred_region
          %s178 = sand.u32 %s29, 1
          %s179 = scalar_lea.sflag [#allocation3], %s178
          %s180 = sand.u32 %s29, 1
          %s181 = smul.addr %s180, 8
          %s182 = scalar_lea.vmem [#allocation2], %s181
          %184 = vsyncadd %s179, 0
          %s185 = smul.addr %s19, 8
          %s186 = scalar_lea.hbm %s0, %s185
          %s188 = sshll.u32 %s186, 4
          %s189 = int_to_ptr.hbm [resolvable:$true] %s188
          %s190 = sshll.u32 %s182, 4
          %s191 = int_to_ptr.vmem [resolvable:$true] %s190
          %193 = dma.hbm_to_vmem [thread:$0]  %s189, 128, %s191, %s179
        $region28: #{tpu_custom_call.1} parent=23 // pred_fallthru
          _
        // Predicated region
        $region29: #{tpu_custom_call.1} parent=23 // pred_check
          %p194 = pneg %p65
        $region30: #{tpu_custom_call.1} parent=23 // pred_check_branch
          %196 = sbr.rel (%p194) target = $region32
        $region31: #{tpu_custom_call.1} parent=23 // pred_region
          %s197 = sand.u32 %s19, 1
          %s198 = scalar_lea.sflag [#allocation6], %s197
          %s199 = sand.u32 %s55, 1
          %s200 = smul.addr %s199, 8
          %s201 = scalar_lea.vmem [#allocation5], %s200
          %203 = vsyncadd %s198, 0
          %s204 = smul.addr %s19, 8
          %s205 = scalar_lea.hbm %s1, %s204
          %s207 = sshll.u32 %s205, 4
          %s208 = int_to_ptr.hbm [resolvable:$true] %s207
          %s209 = sshll.u32 %s201, 4
          %s210 = int_to_ptr.vmem [resolvable:$true] %s209
          %212 = dma.hbm_to_vmem [thread:$0]  %s208, 128, %s210, %s198
        $region32: #{tpu_custom_call.1} parent=23 // pred_fallthru
          _
      $region24: #{tpu_custom_call.1} parent=5 // pred_fallthru
        _
      %p213 = scmp.le.s32.totalorder 1, %s19
      %p214 = scmp.lt.s32.totalorder %s19, 3
      %p215 = pnand %p213, %p214
      %p216 = pneg %p215
      // Predicated region
      $region33: #{tpu_custom_call.1} parent=5 // pred_check
        _
      $region34: #{tpu_custom_call.1} parent=5 // pred_check_branch
        %218 = sbr.rel (%p215) target = $region36
      $region35: #{tpu_custom_call.1} parent=5 // pred_region
        %s219 = ssub.s32 %s19, 1
        %s220 = sand.u32 %s32, 1
        %s221 = scalar_lea.sflag [#allocation3], %s220
        %s222 = sand.u32 %s32, 1
        %s223 = smul.addr %s222, 8
        %s224 = scalar_lea.vmem [#allocation2], %s223
        // Predicated region
        $region37: #{tpu_custom_call.1} parent=35 // pred_check
          %p225 = pneg %p45
        $region38: #{tpu_custom_call.1} parent=35 // pred_check_branch
          %227 = sbr.rel (%p225) target = $region40
        $region39: #{tpu_custom_call.1} parent=35 // pred_region
          %229 = dma.done %s221, 128
        $region40: #{tpu_custom_call.1} parent=35 // pred_fallthru
          _
        %s230 = sand.u32 %s24, 1
        %s231 = scalar_lea.sflag [#allocation6], %s230
        %s232 = sand.u32 %s58, 1
        %s233 = smul.addr %s232, 8
        %s234 = scalar_lea.vmem [#allocation5], %s233
        // Predicated region
        $region41: #{tpu_custom_call.1} parent=35 // pred_check
          %p235 = pneg %p71
        $region42: #{tpu_custom_call.1} parent=35 // pred_check_branch
          %237 = sbr.rel (%p235) target = $region44
        $region43: #{tpu_custom_call.1} parent=35 // pred_region
          %239 = dma.done %s231, 128
        $region44: #{tpu_custom_call.1} parent=35 // pred_fallthru
          _
        // Predicated region
        $region45: #{tpu_custom_call.1} parent=35 // pred_check
          %p240 = pneg %p92
        $region46: #{tpu_custom_call.1} parent=35 // pred_check_branch
          %242 = sbr.rel (%p240) target = $region48
        $region47: #{tpu_custom_call.1} parent=35 // pred_region
          %244 = dma.done [#allocation6], 1024
        $region48: #{tpu_custom_call.1} parent=35 // pred_fallthru
          _
        %s245 = sand.u32 %s32, 1
        %s246 = scalar_lea.sflag [#allocation3], %s245
        %s247 = sand.u32 %s32, 1
        %s248 = smul.addr %s247, 8
        %s249 = scalar_lea.vmem [#allocation2], %s248
        %p250 = pneg %p45
        %p251 = pneg %p42
        %s252 = sand.u32 %s24, 1
        %s253 = scalar_lea.sflag [#allocation6], %s252
        %s254 = sand.u32 %s58, 1
        %s255 = smul.addr %s254, 8
        %s256 = scalar_lea.vmem [#allocation5], %s255
        %p257 = pneg %p71
        %p258 = pneg %p68
        %p259 = pneg %p92
        %p260 = pneg %p89
        %p261 = pneg %p113
        %p262 = pneg %p110
        %p263 = pneg %p139
        %p264 = pneg %p136
        %s265 = sand.u32 %s126, 1
        %s266 = scalar_lea.sflag [#allocation4], %s265
        %s267 = sand.u32 %s126, 1
        %s268 = smul.addr %s267, 8
        %s269 = scalar_lea.vmem [#allocation8], %s268
        %v270 = vld [vmem:[%s234] sm:$0xff]
        %v271 = vld [vmem:[#allocation7] sm:$0xff]
        %v272 = vld [vmem:[#allocation7 + $0x8] sm:$0xff]
        %v273 = vld [vmem:[#allocation7 + $0x10] sm:$0xff]
        %v274 = vld [vmem:[#allocation7 + $0x18] sm:$0xff]
        %v275 = vld [vmem:[#allocation7 + $0x20] sm:$0xff]
        %v276 = vld [vmem:[#allocation7 + $0x28] sm:$0xff]
        %v277 = vld [vmem:[#allocation7 + $0x30] sm:$0xff]
        %v278 = vld [vmem:[#allocation7 + $0x38] sm:$0xff]
        %v279 = vld [vmem:[%s3] sm:$0x3]
        %v281 = vperm.slane %v279, 0
        %v282 = vperm.slane %v279, 1
        %vm285 = vcmask 261120
        %v287 = vsel %vm285, %v270, 0
        %289 = vmatpush.msra.mxu0 0.0
        %290 = vmatpush.msra.mxu0 0.0
        %291 = vmatpush.msra.mxu0 0.0
        %292 = vmatpush.msra.mxu0 0.0
        %293 = vmatpush.msra.mxu0 0.0
        %294 = vmatpush.msra.mxu0 0.0
        %295 = vmatpush.msra.mxu0 0.0
        %296 = vmatpush.msra.mxu0 0.0
        %297 = vmatpush.msra.mxu0 0.0
        %298 = vmatpush.msra.mxu0 0.0
        %299 = vmatpush.msra.mxu0 0.0
        %300 = vmatpush.msra.mxu0 0.0
        %301 = vmatpush.msra.mxu0 %v277
        %302 = vmatpush.msra.mxu0 %v275
        %303 = vmatpush.msra.mxu0 %v273
        %304 = vmatpush.msra.mxu0 %v271
        %305 = vmatmul.f32.gmra.mxu0 %v287
        %v306 = vpop.f32.mrf.mxu0
        %v307 = vadd.f32 %v281, %v306
        %308 = vdwg.mxu0
        %309 = vmatpush.msra.mxu0 0.0
        %310 = vmatpush.msra.mxu0 0.0
        %311 = vmatpush.msra.mxu0 0.0
        %312 = vmatpush.msra.mxu0 0.0
        %313 = vmatpush.msra.mxu0 0.0
        %314 = vmatpush.msra.mxu0 0.0
        %315 = vmatpush.msra.mxu0 0.0
        %316 = vmatpush.msra.mxu0 0.0
        %317 = vmatpush.msra.mxu0 0.0
        %318 = vmatpush.msra.mxu0 0.0
        %319 = vmatpush.msra.mxu0 0.0
        %320 = vmatpush.msra.mxu0 0.0
        %321 = vmatpush.msra.mxu0 %v278
        %322 = vmatpush.msra.mxu0 %v276
        %323 = vmatpush.msra.mxu0 %v274
        %324 = vmatpush.msra.mxu0 %v272
        %325 = vmatmul.f32.gmra.mxu0 %v287
        %v326 = vpop.f32.mrf.mxu0
        %v327 = vadd.f32 %v282, %v326
        %328 = vdwg.mxu0
        %v329 = vld [vmem:[%s224] sm:$0xff]
        %v330 = vmul.f32 %v329, %v307
        %v331 = vadd.f32 %v330, %v327
        %332 = vst [vmem:[%s269] sm:$0xff] %v331
        %s333 = sand.u32 %s126, 1
        %s334 = scalar_lea.sflag [#allocation4], %s333
        %s335 = sand.u32 %s126, 1
        %s336 = smul.addr %s335, 8
        %s337 = scalar_lea.vmem [#allocation8], %s336
        // Predicated region
        $region49: #{tpu_custom_call.1} parent=35 // pred_check
          %p338 = pneg %p136
        $region50: #{tpu_custom_call.1} parent=35 // pred_check_branch
          %340 = sbr.rel (%p338) target = $region52
        $region51: #{tpu_custom_call.1} parent=35 // pred_region
          %342 = vsyncadd %s334, 0
          %s343 = smul.addr %s24, 8
          %s344 = scalar_lea.hbm %s4, %s343
          %s346 = sshll.u32 %s337, 4
          %s347 = int_to_ptr.vmem [resolvable:$true] %s346
          %s348 = sshll.u32 %s344, 4
          %s349 = int_to_ptr.hbm [resolvable:$true] %s348
          %351 = dma.vmem_to_hbm [thread:$0]  %s347, 128, %s349, %s334
        $region52: #{tpu_custom_call.1} parent=35 // pred_fallthru
          _
      $region36: #{tpu_custom_call.1} parent=5 // pred_fallthru
        _
      %p352 = scmp.le.s32.totalorder 2, %s19
      // Predicated region
      $region53: #{tpu_custom_call.1} parent=5 // pred_check
        %p353 = pneg %p352
      $region54: #{tpu_custom_call.1} parent=5 // pred_check_branch
        %355 = sbr.rel (%p353) target = $region56
      $region55: #{tpu_custom_call.1} parent=5 // pred_region
        %s356 = ssub.s32 %s19, 2
        // Predicated region
        $region57: #{tpu_custom_call.1} parent=55 // pred_check
          %p357 = pneg %p142
        $region58: #{tpu_custom_call.1} parent=55 // pred_check_branch
          %359 = sbr.rel (%p357) target = $region60
        $region59: #{tpu_custom_call.1} parent=55 // pred_region
          %s360 = sand.u32 %s127, 1
          %s361 = scalar_lea.sflag [#allocation4], %s360
          %s362 = sand.u32 %s127, 1
          %s363 = smul.addr %s362, 8
          %s364 = scalar_lea.vmem [#allocation8], %s363
          %366 = dma.done %s361, 128
        $region60: #{tpu_custom_call.1} parent=55 // pred_fallthru
          _
      $region56: #{tpu_custom_call.1} parent=5 // pred_fallthru
        _
    $region6: #{tpu_custom_call.1} parent=1 // loop_footer
      %s23 = sadd.s32 1, %s19
    $region7: #{tpu_custom_call.1} parent=1 // loop_footer_branch
      %18 = sbr.rel target = $region3
    $region8: #{tpu_custom_call.1} parent=1 // loop_exit
      _
    %367 = vsyncpa [#allocation3], 1
    %s368 = scalar_lea.sflag [#allocation3], 1
    %369 = vsyncpa %s368, 1
    %370 = vsyncpa [#allocation6], 1
    %s371 = scalar_lea.sflag [#allocation6], 1
    %372 = vsyncpa %s371, 1
    %373 = vsyncpa [#allocation4], 1
    %s374 = scalar_lea.sflag [#allocation4], 1
    %375 = vsyncpa %s374, 1

</llo_original>
